<compile_context>
chip_gen: v6e
topology: v6e:2x2x1
jax: 0.10.0
libtpu: 0.0.40
codegen_flags: <defaults>
</compile_context>

<pallas_src>
import functools

import jax
import jax.numpy as jnp
from jax.experimental import pallas as pl
from jax.experimental.pallas import tpu as pltpu


def _round_up(x: int, m: int) -> int:
    return ((x + m - 1) // m) * m


def _cdiv(a: int, b: int) -> int:
    return -(-a // b)


def _tensorcores_per_chip() -> int:
    """Heuristic: v7x has 2 TensorCores per chip, v5e/v6e have 1."""
    try:
        kind = (getattr(jax.devices()[0], "device_kind", "") or "").lower()
    except Exception:
        return 1
    return 2 if "v7" in kind else 1


def _fused_mlp_kernel(*refs, num_layers: int, compute_dtype):
    """Fused MLP on one resident row tile.

    refs = (x_ref, w0_ref, b0_ref, ..., w_{L-1}_ref, b_{L-1}_ref, o_ref)
      x_ref : (TM, K0)      already compute_dtype
      wi_ref: (Ki, Ni)      compute_dtype (pre-cast in wrapper)
      bi_ref: (1, Ni)       float32
      o_ref : (TM, Np)      Np lane-dense (multiple of 128)
    """
    x_ref = refs[0]
    o_ref = refs[-1]
    wb = refs[1:-1]

    h = x_ref[...]                                   # compute_dtype
    for i in range(num_layers):
        w = wb[2 * i][...]                           # compute_dtype
        b = wb[2 * i + 1][...]                       # float32 (1, N)
        # MXU matmul with f32 accumulation; bias add in f32.
        acc = jnp.dot(h, w, preferred_element_type=jnp.float32) + b
        if i < num_layers - 1:
            # ReLU in f32, store inter-layer activation in compute_dtype.
            h = jnp.maximum(acc, 0.0).astype(compute_dtype)
        else:
            h = acc                                  # last layer stays f32
    o_ref[...] = h.astype(o_ref.dtype)


def _invariant_spec(shape):
    """BlockSpec for a grid-invariant (weights/bias) operand: single-buffered."""
    idx = lambda i: (0,) * len(shape)
    try:
        return pl.BlockSpec(shape, idx, pipeline_mode=pl.Buffered(1))
    except TypeError:  # older jax without pipeline_mode kwarg
        return pl.BlockSpec(shape, idx)


def mlp_forward(x, weights, biases, *, block_rows: int = 512,
                compute_dtype=jnp.bfloat16):
    """x: [..., input_dim]. weights[i]: [in_i, out_i], biases[i]: [out_i]."""
    num_layers = len(weights)
    assert len(biases) == num_layers and num_layers >= 1

    lead_shape = x.shape[:-1]
    in_dim = x.shape[-1]
    out_dim = int(weights[-1].shape[-1])
    out_dtype = x.dtype

    rows = 1
    for d in lead_shape:
        rows *= int(d)

    # ---- Lane-dense output: pad last layer's N to a multiple of 128. -------
    out_dim_p = out_dim if out_dim % 128 == 0 else _round_up(out_dim, 128)
    weights = list(weights)
    biases = list(biases)
    if out_dim_p != out_dim:
        weights[-1] = jnp.pad(weights[-1], ((0, 0), (0, out_dim_p - out_dim)))
        biases[-1] = jnp.pad(biases[-1], ((0, out_dim_p - out_dim),))

    # ---- Pre-cast params: weights in compute_dtype, biases (tiny) in f32. --
    w_c = [w.astype(compute_dtype) for w in weights]
    b_2d = [b.reshape(1, -1).astype(jnp.float32) for b in biases]

    # ---- Balanced row tiling (multiple of 16 for bf16 sublane packing). ----
    nt = max(1, _cdiv(rows, block_rows))
    if nt == 1 and rows >= 32 and _tensorcores_per_chip() >= 2:
        nt = 2                     # use both TensorCores on v7x
    tm = _round_up(_cdiv(rows, nt), 16)
    padded_rows = _round_up(rows, tm)

    h0 = x.reshape(rows, in_dim).astype(compute_dtype)
    if padded_rows != rows:
        h0 = jnp.pad(h0, ((0, padded_rows - rows), (0, 0)))

    in_specs = [pl.BlockSpec((tm, in_dim), lambda i: (i, 0))]   # x row tile
    flat_wb = []
    for w, b in zip(w_c, b_2d):
        in_specs.append(_invariant_spec(tuple(int(s) for s in w.shape)))
        in_specs.append(_invariant_spec(tuple(int(s) for s in b.shape)))
        flat_wb += [w, b]

    flops = 2 * padded_rows * sum(int(w.shape[0]) * int(w.shape[1]) for w in w_c)
    bytes_accessed = (h0.size * h0.dtype.itemsize
                      + sum(w.size * w.dtype.itemsize for w in w_c)
                      + sum(b.size * b.dtype.itemsize for b in b_2d)
                      + padded_rows * out_dim_p * jnp.dtype(out_dtype).itemsize)

    kernel = functools.partial(_fused_mlp_kernel, num_layers=num_layers,
                               compute_dtype=compute_dtype)

    out = pl.pallas_call(
        kernel,
        out_shape=jax.ShapeDtypeStruct((padded_rows, out_dim_p), out_dtype),
        grid_spec=pltpu.PrefetchScalarGridSpec(
            num_scalar_prefetch=0,
            grid=(padded_rows // tm,),
            in_specs=in_specs,
            out_specs=pl.BlockSpec((tm, out_dim_p), lambda i: (i, 0)),
        ),
        compiler_params=pltpu.CompilerParams(
            dimension_semantics=("parallel",),
            vmem_limit_bytes=48 * 1024 * 1024,
        ),
        cost_estimate=pl.CostEstimate(
            flops=flops, transcendentals=0, bytes_accessed=bytes_accessed),
    )(h0, *flat_wb)

    out = out[:rows, :out_dim]
    return out.reshape(*lead_shape, out_dim)


def init_mlp_params(key, input_dim, hidden_dim, output_dim, num_layers,
                    dtype=jnp.float32):
    """Deterministic init matching the PyTorch module's layer shapes."""
    hs = [hidden_dim] * (num_layers - 1)
    in_dims = [input_dim] + hs
    out_dims = hs + [output_dim]
    weights, biases = [], []
    for n, k in zip(in_dims, out_dims):
        key, wk, bk = jax.random.split(key, 3)
        bound = 1.0 / (n ** 0.5)  # PyTorch Linear default: U(-1/sqrt(n), 1/sqrt(n))
        weights.append(jax.random.uniform(wk, (n, k), dtype,
                                          minval=-bound, maxval=bound))
        biases.append(jax.random.uniform(bk, (k,), dtype,
                                         minval=-bound, maxval=bound))
    return weights, biases


def mlp_reference(x, weights, biases, compute_dtype=None):
    """Pure-JAX reference. If compute_dtype is set, matmuls mimic the kernel's
    reduced-precision MXU path (inputs cast, f32 accumulation, f32 bias/ReLU)."""
    num_layers = len(weights)
    h = x.astype(jnp.float32)
    for i, (w, b) in enumerate(zip(weights, biases)):
        if compute_dtype is not None:
            acc = jnp.dot(h.astype(compute_dtype), w.astype(compute_dtype),
                          preferred_element_type=jnp.float32)
        else:
            acc = jnp.dot(h, w, preferred_element_type=jnp.float32)
        h = acc + b.astype(jnp.float32)
        if i < num_layers - 1:
            h = jnp.maximum(h, 0.0)
    return h.astype(x.dtype)


if __name__ == "__main__":
    # Small shapes consistent with DETR's FFN head usage: (batch, queries, dim)
    batch, seq = 2, 8
    input_dim, hidden_dim, output_dim, num_layers = 16, 32, 4, 3

    key = jax.random.PRNGKey(0)
    key, xk = jax.random.split(key)
    x = jax.random.normal(xk, (batch, seq, input_dim), jnp.float32)
    weights, biases = init_mlp_params(
        key, input_dim, hidden_dim, output_dim, num_layers)

    out = mlp_forward(x, weights, biases)
    out = jax.block_until_ready(out)
    assert out.shape == (batch, seq, output_dim), out.shape

    ref_match = mlp_reference(x, weights, biases, compute_dtype=jnp.bfloat16)
    ref_f32 = mlp_reference(x, weights, biases)
    assert jnp.allclose(out, ref_match, atol=1e-2, rtol=1e-2), \
        "mismatch vs bf16-matched reference"
    assert jnp.allclose(out, ref_f32, atol=5e-2, rtol=5e-2), \
        "mismatch vs f32 reference"

    # Ragged-row case (DETR style: batch=1, 100 queries) exercises the balanced
    # row-tile padding (and the 2-tile split on multi-TensorCore chips).
    x2 = jax.random.normal(jax.random.PRNGKey(1), (1, 100, input_dim),
                           jnp.float32)
    out2 = jax.block_until_ready(mlp_forward(x2, weights, biases))
    assert out2.shape == (1, 100, output_dim), out2.shape
    ref2 = mlp_reference(x2, weights, biases, compute_dtype=jnp.bfloat16)
    assert jnp.allclose(out2, ref2, atol=1e-2, rtol=1e-2), \
        "ragged case mismatch vs bf16-matched reference"

    print("KERNEL_OK")
</pallas_src>

<mosaic_0001>
module attributes {stable_mosaic.version = 11 : i64} {
  func.func @_fused_mlp_kernel(%arg0: i32, %arg1: memref<16x16xbf16, #tpu.memory_space<vmem>>, %arg2: memref<16x32xbf16, #tpu.memory_space<vmem>>, %arg3: memref<1x32xf32, #tpu.memory_space<vmem>>, %arg4: memref<32x32xbf16, #tpu.memory_space<vmem>>, %arg5: memref<1x32xf32, #tpu.memory_space<vmem>>, %arg6: memref<32x128xbf16, #tpu.memory_space<vmem>>, %arg7: memref<1x128xf32, #tpu.memory_space<vmem>>, %arg8: memref<16x128xf32, #tpu.memory_space<vmem>>) attributes {dimension_semantics = [#tpu.dimension_semantics<parallel>], iteration_bounds = array<i64: 1>, scalar_prefetch = 0 : i64, scratch_operands = 0 : i64, tpu.core_type = #tpu.core_type<tc>, window_params = [{transform_indices = @transform_0, window_bounds = array<i64: 16, 16>}, {pipeline_mode = #tpu.pipeline_mode<synchronous>, transform_indices = @transform_1, window_bounds = array<i64: 16, 32>}, {pipeline_mode = #tpu.pipeline_mode<synchronous>, transform_indices = @transform_2, window_bounds = array<i64: 1, 32>}, {pipeline_mode = #tpu.pipeline_mode<synchronous>, transform_indices = @transform_3, window_bounds = array<i64: 32, 32>}, {pipeline_mode = #tpu.pipeline_mode<synchronous>, transform_indices = @transform_4, window_bounds = array<i64: 1, 32>}, {pipeline_mode = #tpu.pipeline_mode<synchronous>, transform_indices = @transform_5, window_bounds = array<i64: 32, 128>}, {pipeline_mode = #tpu.pipeline_mode<synchronous>, transform_indices = @transform_6, window_bounds = array<i64: 1, 128>}, {transform_indices = @transform_7, window_bounds = array<i64: 16, 128>}]} {
    %c0 = arith.constant 0 : index
    %c0_0 = arith.constant 0 : index
    %0 = vector.load %arg1[%c0, %c0_0] : memref<16x16xbf16, #tpu.memory_space<vmem>>, vector<16x16xbf16>
    %c0_1 = arith.constant 0 : index
    %c0_2 = arith.constant 0 : index
    %1 = vector.load %arg2[%c0_1, %c0_2] : memref<16x32xbf16, #tpu.memory_space<vmem>>, vector<16x32xbf16>
    %c0_3 = arith.constant 0 : index
    %c0_4 = arith.constant 0 : index
    %2 = vector.load %arg3[%c0_3, %c0_4] : memref<1x32xf32, #tpu.memory_space<vmem>>, vector<1x32xf32>
    %cst = arith.constant dense<0.000000e+00> : vector<16x32xf32>
    %3 = tpu.matmul %0, %1, %cst {dimension_numbers = #tpu.dot_dimension_numbers<[1], [0], [0], [1], [0, 0, 1, 1], [], []>} : vector<16x16xbf16>, vector<16x32xbf16>, vector<16x32xf32> -> vector<16x32xf32>
    %4 = vector.broadcast %2 : vector<1x32xf32> to vector<16x32xf32>
    %5 = arith.addf %3, %4 : vector<16x32xf32>
    %cst_5 = arith.constant 0.000000e+00 : f32
    %6 = vector.broadcast %cst_5 : f32 to vector<16x32xf32>
    %7 = arith.maximumf %5, %6 : vector<16x32xf32>
    %8 = arith.truncf %7 : vector<16x32xf32> to vector<16x32xbf16>
    %c0_6 = arith.constant 0 : index
    %c0_7 = arith.constant 0 : index
    %9 = vector.load %arg4[%c0_6, %c0_7] : memref<32x32xbf16, #tpu.memory_space<vmem>>, vector<32x32xbf16>
    %c0_8 = arith.constant 0 : index
    %c0_9 = arith.constant 0 : index
    %10 = vector.load %arg5[%c0_8, %c0_9] : memref<1x32xf32, #tpu.memory_space<vmem>>, vector<1x32xf32>
    %cst_10 = arith.constant dense<0.000000e+00> : vector<16x32xf32>
    %11 = tpu.matmul %8, %9, %cst_10 {dimension_numbers = #tpu.dot_dimension_numbers<[1], [0], [0], [1], [0, 0, 1, 1], [], []>} : vector<16x32xbf16>, vector<32x32xbf16>, vector<16x32xf32> -> vector<16x32xf32>
    %12 = vector.broadcast %10 : vector<1x32xf32> to vector<16x32xf32>
    %13 = arith.addf %11, %12 : vector<16x32xf32>
    %cst_11 = arith.constant 0.000000e+00 : f32
    %14 = vector.broadcast %cst_11 : f32 to vector<16x32xf32>
    %15 = arith.maximumf %13, %14 : vector<16x32xf32>
    %16 = arith.truncf %15 : vector<16x32xf32> to vector<16x32xbf16>
    %c0_12 = arith.constant 0 : index
    %c0_13 = arith.constant 0 : index
    %17 = vector.load %arg6[%c0_12, %c0_13] : memref<32x128xbf16, #tpu.memory_space<vmem>>, vector<32x128xbf16>
    %c0_14 = arith.constant 0 : index
    %c0_15 = arith.constant 0 : index
    %18 = vector.load %arg7[%c0_14, %c0_15] : memref<1x128xf32, #tpu.memory_space<vmem>>, vector<1x128xf32>
    %cst_16 = arith.constant dense<0.000000e+00> : vector<16x128xf32>
    %19 = tpu.matmul %16, %17, %cst_16 {dimension_numbers = #tpu.dot_dimension_numbers<[1], [0], [0], [1], [0, 0, 1, 1], [], []>} : vector<16x32xbf16>, vector<32x128xbf16>, vector<16x128xf32> -> vector<16x128xf32>
    %20 = vector.broadcast %18 : vector<1x128xf32> to vector<16x128xf32>
    %21 = arith.addf %19, %20 : vector<16x128xf32>
    %c0_17 = arith.constant 0 : index
    %c0_18 = arith.constant 0 : index
    %22 = vector.load %arg8[%c0_17, %c0_18] : memref<16x128xf32, #tpu.memory_space<vmem>>, vector<16x128xf32>
    tpu.vector_store %arg8[%c0_17, %c0_18], %21 {strides = array<i32>} : memref<16x128xf32, #tpu.memory_space<vmem>>, vector<16x128xf32>,
    return
  }
  func.func @transform_0(%arg0: i32) -> (i32, i32) {
    %c0_i32 = arith.constant 0 : i32
    %c0_i32_0 = arith.constant 0 : i32
    return %arg0, %c0_i32 : i32, i32
  }
  func.func @transform_1(%arg0: i32) -> (i32, i32) {
    %c0_i32 = arith.constant 0 : i32
    %c0_i32_0 = arith.constant 0 : i32
    %c0_i32_1 = arith.constant 0 : i32
    return %c0_i32, %c0_i32_0 : i32, i32
  }
  func.func @transform_2(%arg0: i32) -> (i32, i32) {
    %c0_i32 = arith.constant 0 : i32
    %c0_i32_0 = arith.constant 0 : i32
    %c0_i32_1 = arith.constant 0 : i32
    return %c0_i32, %c0_i32_0 : i32, i32
  }
  func.func @transform_3(%arg0: i32) -> (i32, i32) {
    %c0_i32 = arith.constant 0 : i32
    %c0_i32_0 = arith.constant 0 : i32
    %c0_i32_1 = arith.constant 0 : i32
    return %c0_i32, %c0_i32_0 : i32, i32
  }
  func.func @transform_4(%arg0: i32) -> (i32, i32) {
    %c0_i32 = arith.constant 0 : i32
    %c0_i32_0 = arith.constant 0 : i32
    %c0_i32_1 = arith.constant 0 : i32
    return %c0_i32, %c0_i32_0 : i32, i32
  }
  func.func @transform_5(%arg0: i32) -> (i32, i32) {
    %c0_i32 = arith.constant 0 : i32
    %c0_i32_0 = arith.constant 0 : i32
    %c0_i32_1 = arith.constant 0 : i32
    return %c0_i32, %c0_i32_0 : i32, i32
  }
  func.func @transform_6(%arg0: i32) -> (i32, i32) {
    %c0_i32 = arith.constant 0 : i32
    %c0_i32_0 = arith.constant 0 : i32
    %c0_i32_1 = arith.constant 0 : i32
    return %c0_i32, %c0_i32_0 : i32, i32
  }
  func.func @transform_7(%arg0: i32) -> (i32, i32) {
    %c0_i32 = arith.constant 0 : i32
    %c0_i32_0 = arith.constant 0 : i32
    return %arg0, %c0_i32 : i32, i32
  }
}

</mosaic_0001>

<llo_original>
// kernel: tpu_custom_call.1
$region0: #{tpu_custom_call.1}
  #allocation0 [shape = 'u32[]', space=smem, size = 0x4, offset = 0x4, fixed_abs, tag = 'smem constant byte address 0x4 - core index']
  #allocation1 [shape = 'u32[144,128]{1,0:T(1,128)}', space=vmem, size = 0x12000, scoped, tag = 'internal scratch']
  %s0 = inlined_call_operand.hbm [shape: bf16[16,16], index: 0, kind: input, shape index: {}]
  %s1 = inlined_call_operand.hbm [shape: bf16[16,32], index: 1, kind: input, shape index: {}]
  %s2 = inlined_call_operand.vmem [shape: f32[1,32], index: 2, kind: input, shape index: {}]
  %s3 = inlined_call_operand.hbm [shape: bf16[32,32], index: 3, kind: input, shape index: {}]
  %s4 = inlined_call_operand.vmem [shape: f32[1,32], index: 4, kind: input, shape index: {}]
  %s5 = inlined_call_operand.hbm [shape: bf16[32,128], index: 5, kind: input, shape index: {}]
  %s6 = inlined_call_operand.vmem [shape: f32[1,128], index: 6, kind: input, shape index: {}]
  %s7 = inlined_call_operand.hbm [shape: f32[16,128], index: 7, kind: output, shape index: {}]
  %s8 = sld [smem:[#allocation0]]
  $region54: #{tpu_custom_call.1} parent=0
    _
  %s10 = ssub.s32 1, %s8
  %s11 = scalar_select 0, %s10, %s8
  $region1: #{tpu_custom_call.1} parent=0
    #allocation2 [shape = 'u8[4096]{0}', space=vmem, size = 0x1000, scoped, tag = 'input window, operand 0, single buffered']
    #allocation3 [shape = 's32[1]{0}', space=sflag, size = 0x4, scoped, tag = 'scoped memory for tpu_custom_call.1']
    #allocation4 [shape = 's32[1]{0}', space=sflag, size = 0x4, scoped, tag = 'scoped memory for tpu_custom_call.1']
    #allocation5 [shape = 'u8[4096]{0}', space=vmem, size = 0x1000, scoped, tag = 'input window, operand 1, single buffered']
    #allocation6 [shape = 's32[1]{0}', space=sflag, size = 0x4, scoped, tag = 'scoped memory for tpu_custom_call.1']
    #allocation7 [shape = 'u8[8192]{0}', space=vmem, size = 0x2000, scoped, tag = 'input window, operand 3, single buffered']
    #allocation8 [shape = 'u8[8192]{0}', space=vmem, size = 0x2000, scoped, tag = 'input window, operand 5, single buffered']
    #allocation9 [shape = 's32[1]{0}', space=sflag, size = 0x4, scoped, tag = 'scoped memory for tpu_custom_call.1']
    #allocation10 [shape = 'u8[8192]{0}', space=vmem, size = 0x2000, scoped, tag = 'output window, operand 0, single buffered']
    %12 = vsyncpa [#allocation3], 0
    %13 = vsyncpa [#allocation6], 0
    %14 = vsyncpa [#allocation9], 0
    %15 = vsyncpa [#allocation4], 0
    // Predicated region
    $region2: #{tpu_custom_call.1} parent=1 // pred_check
      _
    $region3: #{tpu_custom_call.1} parent=1 // pred_check_branch
      %17 = sbr.rel (0) target = $region5
    $region4: #{tpu_custom_call.1} parent=1 // pred_region
      %s19 = ssub.s32 128, 128
      %20 = vsyncadd [#allocation3], %s19
      %s21 = sshll.u32 [#allocation2], 4
      %s22 = int_to_ptr.vmem [resolvable:$true] %s21
      %27 = dma.hbm_to_vmem [thread:$0]  %s0, 128, %s22, [#allocation3], 64, 64, 4
    $region5: #{tpu_custom_call.1} parent=1 // pred_fallthru
      _
    // Predicated region
    $region6: #{tpu_custom_call.1} parent=1 // pred_check
      _
    $region7: #{tpu_custom_call.1} parent=1 // pred_check_branch
      %29 = sbr.rel (0) target = $region9
    $region8: #{tpu_custom_call.1} parent=1 // pred_region
      %s31 = ssub.s32 128, 128
      %32 = vsyncadd [#allocation6], %s31
      %s33 = sshll.u32 [#allocation5], 4
      %s34 = int_to_ptr.vmem [resolvable:$true] %s33
      %39 = dma.hbm_to_vmem [thread:$0]  %s1, 128, %s34, [#allocation6], 64, 64, 4
    $region9: #{tpu_custom_call.1} parent=1 // pred_fallthru
      _
    // Predicated region
    $region10: #{tpu_custom_call.1} parent=1 // pred_check
      _
    $region11: #{tpu_custom_call.1} parent=1 // pred_check_branch
      %41 = sbr.rel (0) target = $region13
    $region12: #{tpu_custom_call.1} parent=1 // pred_region
      _
    $region13: #{tpu_custom_call.1} parent=1 // pred_fallthru
      _
    // Predicated region
    $region14: #{tpu_custom_call.1} parent=1 // pred_check
      _
    $region15: #{tpu_custom_call.1} parent=1 // pred_check_branch
      %43 = sbr.rel (0) target = $region17
    $region16: #{tpu_custom_call.1} parent=1 // pred_region
      %s45 = ssub.s32 256, 256
      %46 = vsyncadd [#allocation6], %s45
      %s47 = sshll.u32 [#allocation7], 4
      %s48 = int_to_ptr.vmem [resolvable:$true] %s47
      %53 = dma.hbm_to_vmem [thread:$0]  %s3, 256, %s48, [#allocation6], 64, 64, 4
    $region17: #{tpu_custom_call.1} parent=1 // pred_fallthru
      _
    // Predicated region
    $region18: #{tpu_custom_call.1} parent=1 // pred_check
      _
    $region19: #{tpu_custom_call.1} parent=1 // pred_check_branch
      %55 = sbr.rel (0) target = $region21
    $region20: #{tpu_custom_call.1} parent=1 // pred_region
      _
    $region21: #{tpu_custom_call.1} parent=1 // pred_fallthru
      _
    // Predicated region
    $region22: #{tpu_custom_call.1} parent=1 // pred_check
      _
    $region23: #{tpu_custom_call.1} parent=1 // pred_check_branch
      %57 = sbr.rel (0) target = $region25
    $region24: #{tpu_custom_call.1} parent=1 // pred_region
      %s59 = ssub.s32 256, 256
      %60 = vsyncadd [#allocation9], %s59
      %s61 = sshll.u32 [#allocation8], 4
      %s62 = int_to_ptr.vmem [resolvable:$true] %s61
      %67 = dma.hbm_to_vmem [thread:$0]  %s5, 256, %s62, [#allocation9], 64, 64, 4
    $region25: #{tpu_custom_call.1} parent=1 // pred_fallthru
      _
    // Predicated region
    $region26: #{tpu_custom_call.1} parent=1 // pred_check
      _
    $region27: #{tpu_custom_call.1} parent=1 // pred_check_branch
      %69 = sbr.rel (0) target = $region29
    $region28: #{tpu_custom_call.1} parent=1 // pred_region
      _
    $region29: #{tpu_custom_call.1} parent=1 // pred_fallthru
      _
    // Predicated region
    $region30: #{tpu_custom_call.1} parent=1 // pred_check
      _
    $region31: #{tpu_custom_call.1} parent=1 // pred_check_branch
      %71 = sbr.rel (0) target = $region33
    $region32: #{tpu_custom_call.1} parent=1 // pred_region
      %72 = dma.done [#allocation3], 128
    $region33: #{tpu_custom_call.1} parent=1 // pred_fallthru
      _
    // Predicated region
    $region34: #{tpu_custom_call.1} parent=1 // pred_check
      _
    $region35: #{tpu_custom_call.1} parent=1 // pred_check_branch
      %74 = sbr.rel (0) target = $region37
    $region36: #{tpu_custom_call.1} parent=1 // pred_region
      %75 = dma.done [#allocation6], 128
    $region37: #{tpu_custom_call.1} parent=1 // pred_fallthru
      _
    // Predicated region
    $region38: #{tpu_custom_call.1} parent=1 // pred_check
      _
    $region39: #{tpu_custom_call.1} parent=1 // pred_check_branch
      %77 = sbr.rel (0) target = $region41
    $region40: #{tpu_custom_call.1} parent=1 // pred_region
      %78 = dma.done [#allocation6], 256
    $region41: #{tpu_custom_call.1} parent=1 // pred_fallthru
      _
    // Predicated region
    $region42: #{tpu_custom_call.1} parent=1 // pred_check
      _
    $region43: #{tpu_custom_call.1} parent=1 // pred_check_branch
      %80 = sbr.rel (0) target = $region45
    $region44: #{tpu_custom_call.1} parent=1 // pred_region
      %81 = dma.done [#allocation9], 256
    $region45: #{tpu_custom_call.1} parent=1 // pred_fallthru
      _
    %v83 = vld [vmem:[#allocation2] sm:$0xf]
    %v84 = vld [vmem:[#allocation2 + $0x4] sm:$0xf]
    %v85 = vld [vmem:[#allocation5] sm:$0xf]
    %v86 = vld [vmem:[#allocation5 + $0x4] sm:$0xf]
    %v87 = vld [vmem:[%s2] sm:$0x1]
    %v89 = vlaneseq
    %v90 = vshrl.u32 %v89, 7
    %v91 = vsub.s32 0, %v90
    %v92 = vrot.slane %v87, %v91
    %v96 = vunpack.c.l.b16 %v83
    %v97 = vunpack.c.l.b16 %v84
    %v98 = vpack.c.b16 %v97, %v96
    %v101 = vunpack.c.l.b16 %v85
    %v102 = vunpack.c.l.b16 %v86
    %v103 = vpack.c.b16 %v102, %v101
    %vm105 = vcmask 130048
    %v107 = vsel %vm105, %v98, 0
    %109 = vmatprep.subr.bf16.mxu0 0
    %110 = vmatpush1.bf16.msra.mxu0 0
    %111 = vmatprep.subr.bf16.mxu0 0
    %112 = vmatpush1.bf16.msra.mxu0 0
    %113 = vmatprep.subr.bf16.mxu0 0
    %114 = vmatpush1.bf16.msra.mxu0 0
    %115 = vmatprep.subr.bf16.mxu0 0
    %116 = vmatpush1.bf16.msra.mxu0 0
    %117 = vmatprep.subr.bf16.mxu0 0
    %118 = vmatpush1.bf16.msra.mxu0 0
    %119 = vmatprep.subr.bf16.mxu0 0
    %120 = vmatpush1.bf16.msra.mxu0 0
    %121 = vmatprep.subr.bf16.mxu0 0
    %122 = vmatpush1.bf16.msra.mxu0 0
    %123 = vmatprep.subr.bf16.mxu0 0
    %124 = vmatpush1.bf16.msra.mxu0 %v103
    %125 = vmatprep.subr.bf16.mxu0 0
    %126 = vmatpush2.bf16.msra.mxu0 0
    %127 = vmatprep.subr.bf16.mxu0 0
    %128 = vmatpush2.bf16.msra.mxu0 0
    %129 = vmatprep.subr.bf16.mxu0 0
    %130 = vmatpush2.bf16.msra.mxu0 0
    %131 = vmatprep.subr.bf16.mxu0 0
    %132 = vmatpush2.bf16.msra.mxu0 0
    %133 = vmatprep.subr.bf16.mxu0 0
    %134 = vmatpush2.bf16.msra.mxu0 0
    %135 = vmatprep.subr.bf16.mxu0 0
    %136 = vmatpush2.bf16.msra.mxu0 0
    %137 = vmatprep.subr.bf16.mxu0 0
    %138 = vmatpush2.bf16.msra.mxu0 0
    %139 = vmatprep.subr.bf16.mxu0 0
    %140 = vmatpush2.bf16.msra.mxu0 0
    %141 = vmatprep.mubr.bf16.mxu0 0
    %142 = vmatmul.mubr.bf16.gmra.mxu0 %v107
    %v143 = vpop.f32.mrf.mxu0
    %v144 = vadd.f32 %v92, %v143
    %v145 = vpop.f32.mrf.mxu0
    %v146 = vpop.f32.mrf.mxu0
    %v147 = vadd.f32 %v92, %v146
    %v148 = vpop.f32.mrf.mxu0
    %149 = vdwg.mxu0
    %v150 = vmax.f32 %v144, 0.0
    %v151 = vmax.f32 %v147, 0.0
    %v152 = vpack.c.bf16 %v151, %v150
    %v153 = vld [vmem:[#allocation7] sm:$0xf]
    %v154 = vld [vmem:[#allocation7 + $0x4] sm:$0xf]
    %v155 = vld [vmem:[#allocation7 + $0x8] sm:$0xf]
    %v156 = vld [vmem:[#allocation7 + $0xc] sm:$0xf]
    %v157 = vld [vmem:[%s4] sm:$0x1]
    %v159 = vlaneseq
    %v160 = vshrl.u32 %v159, 7
    %v161 = vsub.s32 0, %v160
    %v162 = vrot.slane %v157, %v161
    %v168 = vunpack.c.l.b16 %v153
    %v169 = vunpack.c.l.b16 %v154
    %v170 = vunpack.c.l.b16 %v155
    %v171 = vunpack.c.l.b16 %v156
    %v172 = vpack.c.b16 %v169, %v168
    %v173 = vpack.c.b16 %v171, %v170
    %vm176 = vcmask 261120
    %v178 = vsel %vm176, %v152, 0
    %180 = vmatprep.subr.bf16.mxu0 0
    %181 = vmatpush1.bf16.msra.mxu0 0
    %182 = vmatprep.subr.bf16.mxu0 0
    %183 = vmatpush1.bf16.msra.mxu0 0
    %184 = vmatprep.subr.bf16.mxu0 0
    %185 = vmatpush1.bf16.msra.mxu0 0
    %186 = vmatprep.subr.bf16.mxu0 0
    %187 = vmatpush1.bf16.msra.mxu0 0
    %188 = vmatprep.subr.bf16.mxu0 0
    %189 = vmatpush1.bf16.msra.mxu0 0
    %190 = vmatprep.subr.bf16.mxu0 0
    %191 = vmatpush1.bf16.msra.mxu0 0
    %192 = vmatprep.subr.bf16.mxu0 0
    %193 = vmatpush1.bf16.msra.mxu0 %v173
    %194 = vmatprep.subr.bf16.mxu0 0
    %195 = vmatpush1.bf16.msra.mxu0 %v172
    %196 = vmatprep.subr.bf16.mxu0 0
    %197 = vmatpush2.bf16.msra.mxu0 0
    %198 = vmatprep.subr.bf16.mxu0 0
    %199 = vmatpush2.bf16.msra.mxu0 0
    %200 = vmatprep.subr.bf16.mxu0 0
    %201 = vmatpush2.bf16.msra.mxu0 0
    %202 = vmatprep.subr.bf16.mxu0 0
    %203 = vmatpush2.bf16.msra.mxu0 0
    %204 = vmatprep.subr.bf16.mxu0 0
    %205 = vmatpush2.bf16.msra.mxu0 0
    %206 = vmatprep.subr.bf16.mxu0 0
    %207 = vmatpush2.bf16.msra.mxu0 0
    %208 = vmatprep.subr.bf16.mxu0 0
    %209 = vmatpush2.bf16.msra.mxu0 0
    %210 = vmatprep.subr.bf16.mxu0 0
    %211 = vmatpush2.bf16.msra.mxu0 0
    %212 = vmatprep.mubr.bf16.mxu0 0
    %213 = vmatmul.mubr.bf16.gmra.mxu0 %v178
    %v214 = vpop.f32.mrf.mxu0
    %v215 = vadd.f32 %v162, %v214
    %v216 = vpop.f32.mrf.mxu0
    %v217 = vpop.f32.mrf.mxu0
    %v218 = vadd.f32 %v162, %v217
    %v219 = vpop.f32.mrf.mxu0
    %220 = vdwg.mxu0
    %v221 = vmax.f32 %v215, 0.0
    %v222 = vmax.f32 %v218, 0.0
    %v223 = vpack.c.bf16 %v222, %v221
    %v224 = vld [vmem:[#allocation8] sm:$0xf]
    %v225 = vld [vmem:[#allocation8 + $0x4] sm:$0xf]
    %v226 = vld [vmem:[#allocation8 + $0x8] sm:$0xf]
    %v227 = vld [vmem:[#allocation8 + $0xc] sm:$0xf]
    %v228 = vld [vmem:[%s6] sm:$0x1]
    %v230 = vlaneseq
    %v231 = vshrl.u32 %v230, 7
    %v232 = vsub.s32 0, %v231
    %v233 = vrot.slane %v228, %v232
    %v239 = vunpack.c.l.b16 %v224
    %v240 = vunpack.c.l.b16 %v225
    %v241 = vunpack.c.l.b16 %v226
    %v242 = vunpack.c.l.b16 %v227
    %v243 = vpack.c.b16 %v240, %v239
    %v244 = vpack.c.b16 %v242, %v241
    %v248 = vsel %vm176, %v223, 0
    %250 = vmatprep.subr.bf16.mxu0 0
    %251 = vmatpush1.bf16.msra.mxu0 0
    %252 = vmatprep.subr.bf16.mxu0 0
    %253 = vmatpush1.bf16.msra.mxu0 0
    %254 = vmatprep.subr.bf16.mxu0 0
    %255 = vmatpush1.bf16.msra.mxu0 0
    %256 = vmatprep.subr.bf16.mxu0 0
    %257 = vmatpush1.bf16.msra.mxu0 0
    %258 = vmatprep.subr.bf16.mxu0 0
    %259 = vmatpush1.bf16.msra.mxu0 0
    %260 = vmatprep.subr.bf16.mxu0 0
    %261 = vmatpush1.bf16.msra.mxu0 0
    %262 = vmatprep.subr.bf16.mxu0 0
    %263 = vmatpush1.bf16.msra.mxu0 %v244
    %264 = vmatprep.subr.bf16.mxu0 0
    %265 = vmatpush1.bf16.msra.mxu0 %v243
    %266 = vmatprep.subr.bf16.mxu0 0
    %267 = vmatpush2.bf16.msra.mxu0 0
    %268 = vmatprep.subr.bf16.mxu0 0
    %269 = vmatpush2.bf16.msra.mxu0 0
    %270 = vmatprep.subr.bf16.mxu0 0
    %271 = vmatpush2.bf16.msra.mxu0 0
    %272 = vmatprep.subr.bf16.mxu0 0
    %273 = vmatpush2.bf16.msra.mxu0 0
    %274 = vmatprep.subr.bf16.mxu0 0
    %275 = vmatpush2.bf16.msra.mxu0 0
    %276 = vmatprep.subr.bf16.mxu0 0
    %277 = vmatpush2.bf16.msra.mxu0 0
    %278 = vmatprep.subr.bf16.mxu0 0
    %279 = vmatpush2.bf16.msra.mxu0 0
    %280 = vmatprep.subr.bf16.mxu0 0
    %281 = vmatpush2.bf16.msra.mxu0 0
    %282 = vmatprep.mubr.bf16.mxu0 0
    %283 = vmatmul.mubr.bf16.gmra.mxu0 %v248
    %v284 = vpop.f32.mrf.mxu0
    %v285 = vadd.f32 %v233, %v284
    %v286 = vpop.f32.mrf.mxu0
    %v287 = vpop.f32.mrf.mxu0
    %v288 = vadd.f32 %v233, %v287
    %v289 = vpop.f32.mrf.mxu0
    %290 = vdwg.mxu0
    %291 = vst [vmem:[#allocation10] sm:$0xff] %v285
    %292 = vst [vmem:[#allocation10 + $0x8] sm:$0xff] %v288
    // Predicated region
    $region46: #{tpu_custom_call.1} parent=1 // pred_check
      _
    $region47: #{tpu_custom_call.1} parent=1 // pred_check_branch
      %294 = sbr.rel (0) target = $region49
    $region48: #{tpu_custom_call.1} parent=1 // pred_region
      %s296 = ssub.s32 256, 256
      %297 = vsyncadd [#allocation4], %s296
      %s298 = sshll.u32 [#allocation10], 4
      %s299 = int_to_ptr.vmem [resolvable:$true] %s298
      %304 = dma.vmem_to_hbm [thread:$0]  %s299, 256, %s7, [#allocation4], 128, 128, 8
    $region49: #{tpu_custom_call.1} parent=1 // pred_fallthru
      _
    // Predicated region
    $region50: #{tpu_custom_call.1} parent=1 // pred_check
      _
    $region51: #{tpu_custom_call.1} parent=1 // pred_check_branch
      %306 = sbr.rel (0) target = $region53
    $region52: #{tpu_custom_call.1} parent=1 // pred_region
      %307 = dma.done [#allocation4], 256
    $region53: #{tpu_custom_call.1} parent=1 // pred_fallthru
      _
    %308 = vsyncpa [#allocation3], 1
    %309 = vsyncpa [#allocation6], 1
    %310 = vsyncpa [#allocation9], 1
    %311 = vsyncpa [#allocation4], 1

</llo_original>
